<compile_context>
chip_gen: v7x
topology: tpu7x:2x2x1
jax: 0.10.0
libtpu: 0.0.40
codegen_flags: <defaults>
</compile_context>

<pallas_src>
import jax
import jax.numpy as jnp
from jax.experimental import pallas as pl
from jax.experimental.pallas import tpu as pltpu


_LANE = 128
_TILE_ALIGN = 256          # pad so 256/384/512-wide tiles divide the extent evenly
_SMALL_F_THRESHOLD = 512   # single-shot (no-grid) path below this


# ----------------------------- kernels ---------------------------------------


def _square_small_kernel(a_ref, o_ref):
    """Whole-matrix single-shot W @ W (single input read once into VMEM)."""
    a = a_ref[...]
    o_ref[...] = jnp.dot(a, a, preferred_element_type=jnp.float32).astype(o_ref.dtype)


def _panel_matmul_kernel(a_ref, b_ref, o_ref):
    """Full-K panel matmul: one MXU pass per (i, j) tile, no accumulator needed."""
    o_ref[...] = jnp.dot(
        a_ref[...], b_ref[...], preferred_element_type=jnp.float32
    ).astype(o_ref.dtype)


def _reduce_matmul_kernel_out_acc(a_ref, b_ref, o_ref):
    """3-D tiled matmul accumulating directly into the (f32) resident output block."""
    @pl.when(pl.program_id(2) == 0)
    def _():
        o_ref[...] = jnp.zeros_like(o_ref)

    o_ref[...] += jnp.dot(a_ref[...], b_ref[...], preferred_element_type=jnp.float32)


def _reduce_matmul_kernel_scratch_acc(a_ref, b_ref, o_ref, acc_ref):
    """3-D tiled matmul with f32 scratch accumulator (for bf16 / narrow outputs)."""
    @pl.when(pl.program_id(2) == 0)
    def _():
        acc_ref[...] = jnp.zeros_like(acc_ref)

    acc_ref[...] += jnp.dot(a_ref[...], b_ref[...], preferred_element_type=jnp.float32)

    @pl.when(pl.program_id(2) == pl.num_programs(2) - 1)
    def _():
        o_ref[...] = acc_ref[...].astype(o_ref.dtype)


# ----------------------------- helpers ----------------------------------------


def _vmem_budget_bytes():
    """~75% of per-core VMEM: ~96 MiB on v5e/v6e (128 MiB), ~48 MiB on v7x (64 MiB)."""
    try:
        cap = int(pltpu.get_tpu_info().vmem_capacity_bytes)
    except Exception:
        cap = 64 << 20  # conservative fallback (safe on every generation)
    return (cap * 3) // 4


def _pick_tile(fp, preferred):
    """Largest multiple of 128 <= preferred that divides fp, or fp when fp <= preferred.

    With fp padded to a multiple of 256 this never drops below 256, so the
    256-wide MXU on v6e/v7x stays filled.
    """
    if fp <= preferred:
        return fp
    t = (preferred // _LANE) * _LANE
    while t >= _LANE:
        if fp % t == 0:
            return t
        t -= _LANE
    return fp


# ----------------------------- wrapper ----------------------------------------


def _square_matmul(w2d, *, force_path=None):
    """Compute w2d @ w2d with Pallas. force_path in {None, 'panel', 'reduce'}."""
    F, F2 = w2d.shape
    assert F == F2, "weight must be square"
    dtype = jnp.dtype(w2d.dtype)
    itemsize = dtype.itemsize

    # --- small path: one VMEM-resident block, single input, no grid machinery ---
    if force_path is None and F <= _SMALL_F_THRESHOLD:
        return pl.pallas_call(
            _square_small_kernel,
            out_shape=jax.ShapeDtypeStruct((F, F), dtype),
            cost_estimate=pl.CostEstimate(
                flops=2 * F**3,
                transcendentals=0,
                bytes_accessed=2 * F * F * itemsize,
            ),
        )(w2d)

    # --- tiled paths ------------------------------------------------------------
    # Pad to a multiple of 256 so tiles never degrade to 128-wide (under-filling
    # the 2x256x256 MXU on v6e/v7x).  Zero padding is exact for W @ W.
    Fp = ((F + _TILE_ALIGN - 1) // _TILE_ALIGN) * _TILE_ALIGN
    wp = w2d if Fp == F else jnp.pad(w2d, ((0, Fp - F), (0, Fp - F)))

    vmem_budget = _vmem_budget_bytes()

    # 512-wide M/N tiles: AI high enough to be MXU-bound on all generations.
    tm = _pick_tile(Fp, 512)
    tn = _pick_tile(Fp, 512)
    out_is_f32 = dtype == jnp.dtype(jnp.float32)

    # Panel-path working set: double-buffered lhs row-panel + rhs col-panel +
    # double-buffered output tile.  (No extra 2x factor -- already included.)
    panel_working = (2 * (tm * Fp + Fp * tn) + 2 * tm * tn) * itemsize
    use_panel = force_path == "panel" or (
        force_path is None and panel_working <= vmem_budget
    )

    if use_panel:
        grid = (Fp // tm, Fp // tn)  # j innermost -> lhs panel resident across j
        # v7x megacore: guarantee >= 2 parallel tiles so both TensorCores work.
        if grid[0] * grid[1] < 2 and (Fp // 2) % _LANE == 0:
            tm = Fp // 2
            grid = (2, 1)
            panel_working = (2 * (tm * Fp + Fp * tn) + 2 * tm * tn) * itemsize

        vmem_limit = int(min(max(panel_working + (4 << 20), 16 << 20), vmem_budget))
        outp = pl.pallas_call(
            _panel_matmul_kernel,
            out_shape=jax.ShapeDtypeStruct((Fp, Fp), dtype),
            grid_spec=pltpu.PrefetchScalarGridSpec(
                num_scalar_prefetch=0,
                grid=grid,
                in_specs=[
                    pl.BlockSpec((tm, Fp), lambda i, j: (i, 0)),  # lhs row panel of W
                    pl.BlockSpec((Fp, tn), lambda i, j: (0, j)),  # rhs col panel of W
                ],
                out_specs=pl.BlockSpec((tm, tn), lambda i, j: (i, j)),
            ),
            compiler_params=pltpu.CompilerParams(
                dimension_semantics=("parallel", "parallel"),
                vmem_limit_bytes=vmem_limit,
            ),
            cost_estimate=pl.CostEstimate(
                flops=2 * Fp**3,
                transcendentals=0,
                bytes_accessed=Fp * Fp * (2 + Fp // tm) * itemsize,
            ),
        )(wp, wp)
    else:
        # 3-D reduction fallback (very large F): K innermost / "arbitrary".
        pref_k = 512 if itemsize >= 4 else 1024  # fatter K tiles for bf16
        tk = _pick_tile(Fp, pref_k)
        grid = (Fp // tm, Fp // tn, Fp // tk)

        if out_is_f32:
            kernel = _reduce_matmul_kernel_out_acc
            scratch_shapes = []
        else:
            kernel = _reduce_matmul_kernel_scratch_acc
            scratch_shapes = [pltpu.VMEM((tm, tn), jnp.float32)]

        working = (2 * (tm * tk + tk * tn) + 2 * tm * tn) * itemsize
        if not out_is_f32:
            working += tm * tn * 4
        vmem_limit = int(min(max(working + (8 << 20), 16 << 20), vmem_budget))

        outp = pl.pallas_call(
            kernel,
            out_shape=jax.ShapeDtypeStruct((Fp, Fp), dtype),
            grid_spec=pltpu.PrefetchScalarGridSpec(
                num_scalar_prefetch=0,
                grid=grid,
                in_specs=[
                    pl.BlockSpec((tm, tk), lambda i, j, k: (i, k)),  # lhs = W
                    pl.BlockSpec((tk, tn), lambda i, j, k: (k, j)),  # rhs = W
                ],
                out_specs=pl.BlockSpec((tm, tn), lambda i, j, k: (i, j)),
                scratch_shapes=scratch_shapes,
            ),
            compiler_params=pltpu.CompilerParams(
                dimension_semantics=("parallel", "parallel", "arbitrary"),
                vmem_limit_bytes=vmem_limit,
            ),
            cost_estimate=pl.CostEstimate(
                flops=2 * Fp**3,
                transcendentals=0,
                bytes_accessed=(Fp * Fp * (Fp // tn) + Fp * Fp * (Fp // tm) + Fp * Fp)
                * itemsize,
            ),
        )(wp, wp)

    if Fp != F:
        # Slice off the zero padding.  (Extra ~2*F^2 bytes of HBM traffic; kept
        # for simplicity -- padded output could be consumed directly downstream.)
        outp = outp[:F, :F]
    return outp


def matrix_sqrt_forward(weight, *, force_path=None):
    """Equivalent of MatrixSQRT.forward(): weight.bmm(weight) for weight (1, F, F)."""
    B, F, F2 = weight.shape
    assert B == 1 and F == F2
    out2d = _square_matmul(weight[0], force_path=force_path)
    return out2d[None, :, :]


# TODO(synk): optional bf16-operand / f32-accumulate fast path (3-4x MXU throughput)
# if MatrixSQRT downstream use tolerates bf16 operand precision.


if __name__ == "__main__":
    def _ref(w):
        return jnp.einsum("bij,bjk->bik", w, w)

    root = jax.random.PRNGKey(0)
    k1, k2, k3 = jax.random.split(root, 3)

    # 1) tiny F: single-shot (no-grid) path.
    f1 = 32
    w1 = jax.random.normal(k1, (1, f1, f1), dtype=jnp.float32)
    o1 = jax.block_until_ready(matrix_sqrt_forward(w1))
    assert o1.shape == (1, f1, f1)
    assert jnp.allclose(o1, _ref(w1), atol=1e-4, rtol=1e-4)

    # 2) non-128-divisible F, still in the single-shot regime.
    f2 = 300
    w2 = jax.random.normal(k2, (1, f2, f2), dtype=jnp.float32)
    o2 = jax.block_until_ready(matrix_sqrt_forward(w2))
    assert o2.shape == (1, f2, f2)
    assert jnp.allclose(o2, _ref(w2), atol=1e-3, rtol=1e-3)

    # 3) larger F: pad-to-256 + full-K panel path (2-D parallel grid), and the
    #    3-D K-reduction fallback forced explicitly so every path is exercised.
    f3 = 640
    w3 = jax.random.normal(k3, (1, f3, f3), dtype=jnp.float32)
    r3 = _ref(w3)

    o3 = jax.block_until_ready(matrix_sqrt_forward(w3))
    assert o3.shape == (1, f3, f3)
    assert jnp.allclose(o3, r3, atol=1e-2, rtol=1e-2)

    o3r = jax.block_until_ready(matrix_sqrt_forward(w3, force_path="reduce"))
    assert o3r.shape == (1, f3, f3)
    assert jnp.allclose(o3r, r3, atol=1e-2, rtol=1e-2)

    print("KERNEL_OK")
</pallas_src>

<mosaic_0001>
module attributes {stable_mosaic.version = 11 : i64} {
  func.func @_square_small_kernel(%arg0: memref<32x32xf32, #tpu.memory_space<vmem>>, %arg1: memref<32x32xf32, #tpu.memory_space<vmem>>) attributes {dimension_semantics = [], scalar_prefetch = 0 : i64, scratch_operands = 0 : i64, tpu.core_type = #tpu.core_type<tc>} {
    %c0 = arith.constant 0 : index
    %c0_0 = arith.constant 0 : index
    %0 = vector.load %arg0[%c0, %c0_0] : memref<32x32xf32, #tpu.memory_space<vmem>>, vector<32x32xf32>
    %cst = arith.constant dense<0.000000e+00> : vector<32x32xf32>
    %1 = tpu.matmul %0, %0, %cst {dimension_numbers = #tpu.dot_dimension_numbers<[1], [0], [0], [1], [0, 0, 1, 1], [], []>} : vector<32x32xf32>, vector<32x32xf32>, vector<32x32xf32> -> vector<32x32xf32>
    %c0_1 = arith.constant 0 : index
    %c0_2 = arith.constant 0 : index
    %2 = vector.load %arg1[%c0_1, %c0_2] : memref<32x32xf32, #tpu.memory_space<vmem>>, vector<32x32xf32>
    tpu.vector_store %arg1[%c0_1, %c0_2], %1 {strides = array<i32>} : memref<32x32xf32, #tpu.memory_space<vmem>>, vector<32x32xf32>,
    return
  }
}

</mosaic_0001>

<llo_original>
// kernel: tpu_custom_call.1
$region0: #{tpu_custom_call.1}
  #allocation0 [shape = 'u32[]', space=smem, size = 0x4, offset = 0x4, fixed_abs, tag = 'smem constant byte address 0x4 - core index']
  #allocation1 [shape = 'u32[144,128]{1,0:T(1,128)}', space=vmem, size = 0x12000, scoped, tag = 'internal scratch']
  %s0 = inlined_call_operand.hbm [shape: f32[32,32], index: 0, kind: input, shape index: {}]
  %s1 = inlined_call_operand.hbm [shape: f32[32,32], index: 1, kind: output, shape index: {}]
  %s2 = sld [smem:[#allocation0]]
  $region18: #{tpu_custom_call.1} parent=0
    _
  %s4 = ssub.s32 1, %s2
  %s5 = scalar_select 0, %s4, %s2
  $region1: #{tpu_custom_call.1} parent=0
    #allocation2 [shape = 'u8[16384]{0}', space=vmem, size = 0x4000, scoped, tag = 'input window, operand 0, single buffered']
    #allocation3 [shape = 's32[1]{0}', space=sflag, size = 0x4, scoped, tag = 'scoped memory for tpu_custom_call.1']
    #allocation4 [shape = 's32[1]{0}', space=sflag, size = 0x4, scoped, tag = 'scoped memory for tpu_custom_call.1']
    #allocation5 [shape = 'u8[16384]{0}', space=vmem, size = 0x4000, scoped, tag = 'output window, operand 0, single buffered']
    %6 = vsyncpa [#allocation3], 0
    %7 = vsyncpa [#allocation4], 0
    // Predicated region
    $region2: #{tpu_custom_call.1} parent=1 // pred_check
      _
    $region3: #{tpu_custom_call.1} parent=1 // pred_check_branch
      %9 = sbr.rel (0) target = $region5
    $region4: #{tpu_custom_call.1} parent=1 // pred_region
      %s11 = ssub.s32 512, 512
      %12 = vsyncadd [#allocation3], %s11
      %s13 = sshll.u32 [#allocation2], 4
      %s14 = int_to_ptr.vmem [resolvable:$true] %s13
      %19 = dma.hbm_to_vmem [thread:$0]  %s0, 512, %s14, [#allocation3], 128, 128, 8
    $region5: #{tpu_custom_call.1} parent=1 // pred_fallthru
      _
    // Predicated region
    $region6: #{tpu_custom_call.1} parent=1 // pred_check
      _
    $region7: #{tpu_custom_call.1} parent=1 // pred_check_branch
      %21 = sbr.rel (0) target = $region9
    $region8: #{tpu_custom_call.1} parent=1 // pred_region
      %22 = dma.done [#allocation3], 512
    $region9: #{tpu_custom_call.1} parent=1 // pred_fallthru
      _
    %v23 = vld [vmem:[#allocation2] sm:$0xff]
    %v24 = vld [vmem:[#allocation2 + $0x8] sm:$0xff]
    %v25 = vld [vmem:[#allocation2 + $0x10] sm:$0xff]
    %v26 = vld [vmem:[#allocation2 + $0x18] sm:$0xff]
    %vm27 = vcmask 261120
    %v29 = vsel %vm27, %v23, 0
    %v32 = vsel %vm27, %v24, 0
    %v35 = vsel %vm27, %v25, 0
    %v38 = vsel %vm27, %v26, 0
    %40 = vmatprep.subr.mxu0 0.0
    %41 = vmatpush1.msra.mxu0 %v23
    %42 = vmatprep.subr.mxu0 0.0
    %43 = vmatpush1.msra.mxu0 %v24
    %44 = vmatprep.subr.mxu0 0.0
    %45 = vmatpush1.msra.mxu0 %v25
    %46 = vmatprep.subr.mxu0 0.0
    %47 = vmatpush1.msra.mxu0 %v26
    %48 = vmatprep.subr.mxu0 0.0
    %49 = vmatpush1.msra.mxu0 0.0
    %50 = vmatprep.subr.mxu0 0.0
    %51 = vmatpush1.msra.mxu0 0.0
    %52 = vmatprep.subr.mxu0 0.0
    %53 = vmatpush1.msra.mxu0 0.0
    %54 = vmatprep.subr.mxu0 0.0
    %55 = vmatpush1.msra.mxu0 0.0
    %56 = vmatprep.subr.mxu0 0.0
    %57 = vmatpush1.msra.mxu0 0.0
    %58 = vmatprep.subr.mxu0 0.0
    %59 = vmatpush1.msra.mxu0 0.0
    %60 = vmatprep.subr.mxu0 0.0
    %61 = vmatpush1.msra.mxu0 0.0
    %62 = vmatprep.subr.mxu0 0.0
    %63 = vmatpush1.msra.mxu0 0.0
    %64 = vmatprep.subr.mxu0 0.0
    %65 = vmatpush1.msra.mxu0 0.0
    %66 = vmatprep.subr.mxu0 0.0
    %67 = vmatpush1.msra.mxu0 0.0
    %68 = vmatprep.subr.mxu0 0.0
    %69 = vmatpush1.msra.mxu0 0.0
    %70 = vmatprep.subr.mxu0 0.0
    %71 = vmatpush1.msra.mxu0 0.0
    %72 = vmatprep.subr.mxu0 0.0
    %73 = vmatpush1.msra.mxu0 0.0
    %74 = vmatprep.subr.mxu0 0.0
    %75 = vmatpush1.msra.mxu0 0.0
    %76 = vmatprep.subr.mxu0 0.0
    %77 = vmatpush1.msra.mxu0 0.0
    %78 = vmatprep.subr.mxu0 0.0
    %79 = vmatpush1.msra.mxu0 0.0
    %80 = vmatprep.subr.mxu0 0.0
    %81 = vmatpush1.msra.mxu0 0.0
    %82 = vmatprep.subr.mxu0 0.0
    %83 = vmatpush1.msra.mxu0 0.0
    %84 = vmatprep.subr.mxu0 0.0
    %85 = vmatpush1.msra.mxu0 0.0
    %86 = vmatprep.subr.mxu0 0.0
    %87 = vmatpush1.msra.mxu0 0.0
    %88 = vmatprep.subr.mxu0 0.0
    %89 = vmatpush1.msra.mxu0 0.0
    %90 = vmatprep.subr.mxu0 0.0
    %91 = vmatpush1.msra.mxu0 0.0
    %92 = vmatprep.subr.mxu0 0.0
    %93 = vmatpush1.msra.mxu0 0.0
    %94 = vmatprep.subr.mxu0 0.0
    %95 = vmatpush1.msra.mxu0 0.0
    %96 = vmatprep.subr.mxu0 0.0
    %97 = vmatpush1.msra.mxu0 0.0
    %98 = vmatprep.subr.mxu0 0.0
    %99 = vmatpush1.msra.mxu0 0.0
    %100 = vmatprep.subr.mxu0 0.0
    %101 = vmatpush1.msra.mxu0 0.0
    %102 = vmatprep.subr.mxu0 0.0
    %103 = vmatpush1.msra.mxu0 0.0
    %104 = vmatprep.mubr.f32.mxu0 0.0
    %105 = vmatmul.mubr.f32.gmra.mrb[0].mxu0 %v29
    %v106 = vpop.f32.mrb[0].mxu0
    %v107 = vadd.f32 0.0, %v106
    %v108 = vpop.f32.mrb[0].mxu0
    %109 = vmatprep.mubr.f32.mxu0 0.0
    %110 = vmatmul.mubr.f32.gmra.mrb[0].mxu0 %v32
    %v111 = vpop.f32.mrb[0].mxu0
    %v112 = vadd.f32 0.0, %v111
    %v113 = vpop.f32.mrb[0].mxu0
    %114 = vmatprep.mubr.f32.mxu0 0.0
    %115 = vmatmul.mubr.f32.gmra.mrb[0].mxu0 %v35
    %v116 = vpop.f32.mrb[0].mxu0
    %v117 = vadd.f32 0.0, %v116
    %v118 = vpop.f32.mrb[0].mxu0
    %119 = vmatprep.mubr.f32.mxu0 0.0
    %120 = vmatmul.mubr.f32.gmra.mrb[0].mxu0 %v38
    %v121 = vpop.f32.mrb[0].mxu0
    %v122 = vadd.f32 0.0, %v121
    %v123 = vpop.f32.mrb[0].mxu0
    %124 = vdwg.mxu0
    %125 = vst.msk [vmem:[#allocation5] sm:$0xff] %vm27, %v107
    %126 = vst.msk [vmem:[#allocation5 + $0x8] sm:$0xff] %vm27, %v112
    %127 = vst.msk [vmem:[#allocation5 + $0x10] sm:$0xff] %vm27, %v117
    %128 = vst.msk [vmem:[#allocation5 + $0x18] sm:$0xff] %vm27, %v122
    // Predicated region
    $region10: #{tpu_custom_call.1} parent=1 // pred_check
      _
    $region11: #{tpu_custom_call.1} parent=1 // pred_check_branch
      %130 = sbr.rel (0) target = $region13
    $region12: #{tpu_custom_call.1} parent=1 // pred_region
      %s132 = ssub.s32 512, 512
      %133 = vsyncadd [#allocation4], %s132
      %s134 = sshll.u32 [#allocation5], 4
      %s135 = int_to_ptr.vmem [resolvable:$true] %s134
      %140 = dma.vmem_to_hbm [thread:$0]  %s135, 512, %s1, [#allocation4], 128, 128, 8
    $region13: #{tpu_custom_call.1} parent=1 // pred_fallthru
      _
    // Predicated region
    $region14: #{tpu_custom_call.1} parent=1 // pred_check
      _
    $region15: #{tpu_custom_call.1} parent=1 // pred_check_branch
      %142 = sbr.rel (0) target = $region17
    $region16: #{tpu_custom_call.1} parent=1 // pred_region
      %143 = dma.done [#allocation4], 512
    $region17: #{tpu_custom_call.1} parent=1 // pred_fallthru
      _
    %144 = vsyncpa [#allocation3], 1
    %145 = vsyncpa [#allocation4], 1

</llo_original>
